<compile_context>
chip_gen: v6e
topology: v6e:2x2x1
jax: 0.10.0
libtpu: 0.0.40
codegen_flags: <defaults>
</compile_context>

<pallas_src>
import numpy as np
import jax
import jax.numpy as jnp
from jax.experimental import pallas as pl
from jax.experimental.pallas import tpu as pltpu


# ----------------------------- helpers ---------------------------------------
def _round_up(x: int, m: int) -> int:
    return (x + m - 1) // m * m


def _pick_score_tiles(n_pad: int):
    """(tile_k, tile_j) for the N^2 score pass.

    tile_k: reduction depth (256-512 keeps per-step DMAs big without blowing
    VMEM when tile_j is wide).  tile_j: lane/output width, as wide as possible
    (long contiguous DMA rows, fewer grid steps, unmasked wide stores) while
    keeping >= 2 "parallel" grid steps so both v7x TensorCores get work.
    VMEM cost: 2 buffers x tile_k*tile_j*2B <= 4 MiB, fine on all generations.
    """
    tile_k = next((c for c in (512, 256, 128) if n_pad % c == 0), n_pad)
    tile_j = n_pad
    for c in (2048, 1024, 512, 256, 128):
        if n_pad % c == 0 and n_pad // c >= 2:
            tile_j = c
            break
    return tile_k, tile_j


def prepare_adjacency(a_norm, dtype=jnp.bfloat16):
    """Pad the symmetric-normalized adjacency to a multiple of 128 and cast to
    the MXU input dtype ONCE at graph-setup time.  The padded region MUST stay
    zero: the tiled reduction relies on it.  Pass dtype=jnp.float32 if topk
    ranking fidelity of near-tied scores matters (bf16 ~2^-8 rel. error)."""
    n = a_norm.shape[0]
    n_pad = _round_up(n, 128)
    return jnp.zeros((n_pad, n_pad), dtype).at[:n, :n].set(a_norm.astype(dtype))


# ------------------- kernel 1a: xw^T = (X @ W)^T, lane-dense ------------------
def _xw_kernel(w_ref, xt_ref, o_ref):
    # o (1, tile) = sum_d W[d] * X^T[d, tile]  (VPU multiply + sublane reduce,
    # avoids a 1-column MXU pass).
    o_ref[...] = jnp.sum(xt_ref[...] * w_ref[...], axis=0, keepdims=True)


# ------------------- kernel 1b: s^T = xw^T @ A_norm + b  (tiled) --------------
def _score_kernel(xw_ref, a_ref, b_ref, s_ref, t_ref):
    kk = pl.program_id(1)

    @pl.when(kk == 0)
    def _():
        s_ref[...] = jnp.zeros_like(s_ref)

    # Accumulate directly into the (constant-block-index, VMEM-resident)
    # f32 output tile; MXU inputs are whatever dtype A was prepared in.
    s_ref[...] += jnp.dot(xw_ref[...], a_ref[...],
                          preferred_element_type=jnp.float32)

    @pl.when(kk == pl.num_programs(1) - 1)
    def _():
        s = s_ref[...] + b_ref[0, 0]        # bias: free scalar add from SMEM
        s_ref[...] = s
        t_ref[...] = jnp.tanh(s)            # fused tanh (EUP), lane-dense


def graphconv_score(a_prepared, x, w, b):
    """GraphConv(in_dim -> 1, norm='both') score.

    a_prepared: output of prepare_adjacency() (padded, zero tail, MXU dtype,
    computed once per graph).  Since A_norm is symmetric, the score is computed
    lane-dense:  s^T (1,N) = (X @ W)^T @ A_norm + b.
    Returns (score, tanh(score)), each shape (N,).
    """
    n, d = x.shape
    n_pad = a_prepared.shape[0]
    assert n_pad % 128 == 0 and n_pad >= n and a_prepared.shape[1] == n_pad
    tile_k, tile_j = _pick_score_tiles(n_pad)

    # ---- stage 1: xw^T = (X @ W)^T as a lane-dense (1, n_pad) vector --------
    # Wrapper-side transpose/pad of X is layout plumbing (N*D bytes, tiny vs
    # the N^2 adjacency traffic).  Padded tail stays zero.
    x_t = jnp.zeros((d, n_pad), jnp.float32).at[:, :n].set(
        x.astype(jnp.float32).T)
    w_col = jnp.asarray(w, jnp.float32).reshape(d, 1)

    xw_t = pl.pallas_call(
        _xw_kernel,
        grid_spec=pltpu.PrefetchScalarGridSpec(
            num_scalar_prefetch=0,
            grid=(n_pad // tile_j,),
            in_specs=[
                pl.BlockSpec((d, 1), lambda j: (0, 0)),
                pl.BlockSpec((d, tile_j), lambda j: (0, j)),
            ],
            out_specs=pl.BlockSpec((1, tile_j), lambda j: (0, j)),
        ),
        out_shape=jax.ShapeDtypeStruct((1, n_pad), jnp.float32),
        compiler_params=pltpu.CompilerParams(
            dimension_semantics=("parallel",)),
    )(w_col, x_t)

    # ---- stage 2: s^T = xw^T @ A_norm + b  (A symmetric => equals (A @ xw)^T)
    xw_in = xw_t.astype(a_prepared.dtype)      # (1, n_pad): tiny cast
    b_smem = jnp.asarray(b, jnp.float32).reshape(1, 1)

    grid = (n_pad // tile_j, n_pad // tile_k)  # (j: output cols, k: reduction)
    s_t, tanh_t = pl.pallas_call(
        _score_kernel,
        grid_spec=pltpu.PrefetchScalarGridSpec(
            num_scalar_prefetch=0,
            grid=grid,
            in_specs=[
                pl.BlockSpec((1, tile_k), lambda j, k: (0, k)),        # xw^T chunk
                pl.BlockSpec((tile_k, tile_j), lambda j, k: (k, j)),   # A tile
                pl.BlockSpec(memory_space=pltpu.MemorySpace.SMEM),     # bias
            ],
            out_specs=[
                pl.BlockSpec((1, tile_j), lambda j, k: (0, j)),
                pl.BlockSpec((1, tile_j), lambda j, k: (0, j)),
            ],
        ),
        out_shape=(jax.ShapeDtypeStruct((1, n_pad), jnp.float32),
                   jax.ShapeDtypeStruct((1, n_pad), jnp.float32)),
        compiler_params=pltpu.CompilerParams(
            dimension_semantics=("parallel", "arbitrary"),
            vmem_limit_bytes=32 * 1024 * 1024,
        ),
    )(xw_in, a_prepared, b_smem)

    return s_t[0, :n], tanh_t[0, :n]


# ------------------- kernel 2: block row-gather + scale -----------------------
def _gather_scale_kernel(perm_ref, feat_ref, scale_ref, out_ref, rows_ref):
    # One grid step handles a block of `bk` output rows:
    #   rows[r, :] = feature[perm[base + r], :]   (unrolled dynamic row copies
    #                                              into a VMEM scratch)
    #   out        = rows * scale_block           (single fused lane-dense store)
    i = pl.program_id(0)
    bk = out_ref.shape[0]
    base = i * bk

    def body(r, carry):
        idx = perm_ref[base + r]                       # scalar read from SMEM
        rows_ref[pl.ds(r, 1), :] = feat_ref[pl.ds(idx, 1), :]
        return carry

    # unroll=8: each iteration is a dependent SMEM-load -> vld -> vst chain;
    # unrolling lets the scheduler overlap address gen / loads / stores.
    jax.lax.fori_loop(0, bk, body, 0, unroll=8)
    out_ref[...] = (rows_ref[...] * scale_ref[...]).astype(out_ref.dtype)


def gather_and_scale(feature, scale, perm, *, block_rows=128):
    """out[i] = feature[perm[i]] * scale[i], with scale = tanh(score)[perm]."""
    n, d = feature.shape
    k = int(perm.shape[0])
    bk = min(block_rows, _round_up(k, 8))
    k_pad = _round_up(k, bk)

    perm_pad = jnp.zeros((k_pad,), jnp.int32).at[:k].set(perm.astype(jnp.int32))
    scale_pad = jnp.zeros((k_pad, 1), jnp.float32).at[:k, 0].set(
        scale.astype(jnp.float32))

    # Explicit scoped-VMEM limit: feature block is single-buffered
    # (pl.Buffered(1), constant block index), output/scale double-buffered,
    # plus the row scratch.  v5e's scoped default is only 16 MiB.
    itemsize = int(np.dtype(feature.dtype).itemsize)
    needed = (n * d * itemsize                 # resident feature (1 buffer)
              + 2 * bk * d * itemsize          # output blocks (2 buffers)
              + 2 * bk * 128 * 4               # scale blocks (lane-padded)
              + bk * d * itemsize)             # row scratch
    vmem_limit = int(min(max(needed + (4 << 20), 16 << 20), 96 << 20))

    # TODO(synk): when n*d*itemsize exceeds ~24-32 MB (v7x: 64 MiB VMEM/TC),
    # switch the feature input to memory_space=pl.ANY and do a manual
    # perm-indexed row DMA gather with 4-8 outstanding make_async_copy's
    # (SemaphoreType.DMA((depth,))) instead of VMEM residency.
    out = pl.pallas_call(
        _gather_scale_kernel,
        grid_spec=pltpu.PrefetchScalarGridSpec(
            num_scalar_prefetch=1,                     # perm -> SMEM
            grid=(k_pad // bk,),
            in_specs=[
                # Whole feature matrix resident in VMEM; constant block index
                # => fetched once, reused every grid step, single-buffered.
                pl.BlockSpec((n, d), lambda i, perm: (0, 0),
                             pipeline_mode=pl.Buffered(buffer_count=1)),
                pl.BlockSpec((bk, 1), lambda i, perm: (i, 0)),
            ],
            out_specs=pl.BlockSpec((bk, d), lambda i, perm: (i, 0)),
            scratch_shapes=[pltpu.VMEM((bk, d), feature.dtype)],
        ),
        out_shape=jax.ShapeDtypeStruct((k_pad, d), feature.dtype),
        compiler_params=pltpu.CompilerParams(
            dimension_semantics=("parallel",),
            vmem_limit_bytes=vmem_limit,
        ),
    )(perm_pad, feature, scale_pad)
    return out[:k]


# ----------------------------- plain-JAX glue: topk ---------------------------
def topk_perm(score, num_nodes, ratio):
    """Reproduces topk() from the reference: per-graph descending sort, keep
    ceil(ratio * num_nodes[i]) global node indices per graph."""
    num_nodes = np.asarray(num_nodes, np.int64)
    batch_size = int(num_nodes.shape[0])
    max_nn = int(num_nodes.max())
    cum = np.concatenate([[0], np.cumsum(num_nodes)[:-1]]).astype(np.int64)
    batch_id = np.repeat(np.arange(batch_size), num_nodes)
    node_idx = np.arange(int(num_nodes.sum()))
    dense_idx = node_idx - cum[batch_id] + batch_id * max_nn   # static numpy

    fill = jnp.finfo(score.dtype).min
    dense = jnp.full((batch_size * max_nn,), fill, score.dtype)
    dense = dense.at[jnp.asarray(dense_idx)].set(score)
    dense = dense.reshape(batch_size, max_nn)
    # TODO(synk): per-graph descending sort has no clean Pallas equivalent;
    # done with jnp.argsort in plain-JAX glue.
    order = jnp.argsort(-dense, axis=-1)
    perm = (order + jnp.asarray(cum)[:, None]).reshape(-1)

    k = np.ceil(ratio * num_nodes.astype(np.float64)).astype(np.int64)
    mask = np.concatenate(
        [np.arange(k[i]) + i * max_nn for i in range(batch_size)])
    perm = perm[jnp.asarray(mask)].astype(jnp.int32)
    return perm, k


# ----------------------------- SAGPool module ---------------------------------
class SAGPoolPallas:
    def __init__(self, in_dim: int, ratio: float = 0.5, key=None):
        self.in_dim = in_dim
        self.ratio = ratio
        key = jax.random.PRNGKey(0) if key is None else key
        # GraphConv(in_dim, 1): xavier-uniform weight, zero bias (deterministic)
        limit = float(np.sqrt(6.0 / (in_dim + 1)))
        self.w = jax.random.uniform(key, (in_dim, 1), jnp.float32, -limit, limit)
        self.b = jnp.zeros((1, 1), jnp.float32)

    def __call__(self, a_prepared, feature, num_nodes):
        # a_prepared: cached output of prepare_adjacency() (graph-setup time).
        # score = GraphConv(graph, feature).squeeze(); tanh fused in-kernel.
        score, tanh_score = graphconv_score(a_prepared, feature, self.w, self.b)
        perm, next_batch_num_nodes = topk_perm(score, num_nodes, self.ratio)
        # tanh is monotonic & already computed for all nodes -> just gather the
        # k needed scale values once (tiny glue gather), no per-row score DMAs.
        scale = tanh_score[perm]
        feat_out = gather_and_scale(feature, scale, perm)
        # TODO(synk): dgl.node_subgraph / set_batch_num_nodes (graph rebuild)
        # has no Pallas equivalent; we return perm + new per-graph node counts.
        return feat_out, perm, next_batch_num_nodes


# ----------------------------------- main --------------------------------------
if __name__ == "__main__":
    key = jax.random.PRNGKey(0)
    kf, kw = jax.random.split(key)

    in_dim = 128                   # lane-dense feature dim
    num_nodes = [500, 524]         # 2 graphs in the batch, N=1024
    N = int(sum(num_nodes))

    # Block-diagonal undirected ring graph per component, symmetrically
    # normalized (D^{-1/2} A D^{-1/2}) — DGL GraphConv norm='both'.
    A = np.zeros((N, N), np.float32)
    off = 0
    for nn in num_nodes:
        for j in range(nn):
            a = off + j
            b = off + (j + 1) % nn
            A[a, b] = 1.0
            A[b, a] = 1.0
        off += nn
    deg = A.sum(axis=1)
    dinv = 1.0 / np.sqrt(deg)
    a_norm = jnp.asarray(dinv[:, None] * A * dinv[None, :], jnp.float32)

    # Graph-setup-time cache: padded + cast adjacency, reused every forward.
    a_prepared = prepare_adjacency(a_norm)

    feature = jax.random.normal(kf, (N, in_dim), jnp.float32)

    pool = SAGPoolPallas(in_dim, ratio=0.5, key=kw)
    feat_out, perm, next_nn = pool(a_prepared, feature, num_nodes)
    jax.block_until_ready(feat_out)
    jax.block_until_ready(perm)

    # Sanity check against a plain f32 reference using the kernel's own perm
    # (loose tolerance: the adjacency pass feeds the MXU in bf16).
    score_ref = (np.asarray(a_norm) @ (np.asarray(feature) @ np.asarray(pool.w))
                 + np.asarray(pool.b)).reshape(-1)
    perm_np = np.asarray(perm)
    feat_ref = np.asarray(feature)[perm_np] * np.tanh(score_ref[perm_np])[:, None]
    np.testing.assert_allclose(np.asarray(feat_out), feat_ref, rtol=1e-1, atol=1e-1)

    assert feat_out.shape == (int(next_nn.sum()), in_dim)
    print("KERNEL_OK")
</pallas_src>

<mosaic_0001>
module attributes {stable_mosaic.version = 11 : i64} {
  func.func @_xw_kernel(%arg0: i32, %arg1: memref<128x1xf32, #tpu.memory_space<vmem>>, %arg2: memref<128x512xf32, #tpu.memory_space<vmem>>, %arg3: memref<1x512xf32, #tpu.memory_space<vmem>>) attributes {dimension_semantics = [#tpu.dimension_semantics<parallel>], iteration_bounds = array<i64: 2>, scalar_prefetch = 0 : i64, scratch_operands = 0 : i64, tpu.core_type = #tpu.core_type<tc>, window_params = [{pipeline_mode = #tpu.pipeline_mode<synchronous>, transform_indices = @transform_0, window_bounds = array<i64: 128, 1>}, {transform_indices = @transform_1, window_bounds = array<i64: 128, 512>}, {transform_indices = @transform_2, window_bounds = array<i64: 1, 512>}]} {
    %c0 = arith.constant 0 : index
    %c0_0 = arith.constant 0 : index
    %0 = vector.load %arg2[%c0, %c0_0] : memref<128x512xf32, #tpu.memory_space<vmem>>, vector<128x512xf32>
    %c0_1 = arith.constant 0 : index
    %c0_2 = arith.constant 0 : index
    %1 = vector.load %arg1[%c0_1, %c0_2] : memref<128x1xf32, #tpu.memory_space<vmem>>, vector<128x1xf32>
    %2 = vector.broadcast %1 : vector<128x1xf32> to vector<128x512xf32>
    %3 = arith.mulf %0, %2 : vector<128x512xf32>
    %cst = arith.constant dense<0.000000e+00> : vector<512xf32>
    %4 = vector.multi_reduction <add>, %3, %cst [0] : vector<128x512xf32> to vector<512xf32>
    %5 = vector.shape_cast %4 : vector<512xf32> to vector<1x512xf32>
    %c0_3 = arith.constant 0 : index
    %c0_4 = arith.constant 0 : index
    %6 = vector.load %arg3[%c0_3, %c0_4] : memref<1x512xf32, #tpu.memory_space<vmem>>, vector<1x512xf32>
    tpu.vector_store %arg3[%c0_3, %c0_4], %5 {strides = array<i32>} : memref<1x512xf32, #tpu.memory_space<vmem>>, vector<1x512xf32>,
    return
  }
  func.func @transform_0(%arg0: i32) -> (i32, i32) {
    %c0_i32 = arith.constant 0 : i32
    %c0_i32_0 = arith.constant 0 : i32
    %c0_i32_1 = arith.constant 0 : i32
    return %c0_i32, %c0_i32_0 : i32, i32
  }
  func.func @transform_1(%arg0: i32) -> (i32, i32) {
    %c0_i32 = arith.constant 0 : i32
    %c0_i32_0 = arith.constant 0 : i32
    return %c0_i32, %arg0 : i32, i32
  }
  func.func @transform_2(%arg0: i32) -> (i32, i32) {
    %c0_i32 = arith.constant 0 : i32
    %c0_i32_0 = arith.constant 0 : i32
    return %c0_i32, %arg0 : i32, i32
  }
}

</mosaic_0001>

<llo_original>
// kernel: tpu_custom_call.1
$region0: #{tpu_custom_call.1}
  #allocation0 [shape = 'u32[]', space=smem, size = 0x4, offset = 0x4, fixed_abs, tag = 'smem constant byte address 0x4 - core index']
  #allocation1 [shape = 'u32[144,128]{1,0:T(1,128)}', space=vmem, size = 0x12000, scoped, tag = 'internal scratch']
  %s0 = inlined_call_operand.vmem [shape: f32[128,1], index: 0, kind: input, shape index: {}]
  %s1 = inlined_call_operand.hbm [shape: f32[128,1024], index: 1, kind: input, shape index: {}]
  %s2 = inlined_call_operand.hbm [shape: f32[1,1024], index: 2, kind: output, shape index: {}]
  %s3 = sld [smem:[#allocation0]]
  $region45: #{tpu_custom_call.1} parent=0
    _
  %s5 = ssub.s32 1, %s3
  %s6 = scalar_select 0, %s5, %s3
  $region1: #{tpu_custom_call.1} parent=0
    #allocation2 [shape = 'u8[524288]{0}', space=vmem, size = 0x80000, scoped, tag = 'input window, operand 1']
    #allocation3 [shape = 's32[2]{0}', space=sflag, size = 0x8, scoped, tag = 'scoped memory for tpu_custom_call.1']
    #allocation4 [shape = 's32[2]{0}', space=sflag, size = 0x8, scoped, tag = 'scoped memory for tpu_custom_call.1']
    #allocation5 [shape = 'u8[4096]{0}', space=vmem, size = 0x1000, scoped, tag = 'output window, operand 0']
    %7 = vsyncpa [#allocation3], 0
    %s8 = scalar_lea.sflag [#allocation3], 1
    %9 = vsyncpa %s8, 0
    %10 = vsyncpa [#allocation4], 0
    %s11 = scalar_lea.sflag [#allocation4], 1
    %12 = vsyncpa %s11, 0
    loop: start=0, step=1, limit=4
    $region2: #{tpu_custom_call.1} parent=1 // loop_pre_header
      _
    $region3: #{tpu_custom_call.1} parent=1 // loop_header
      %s14 = sphi 0, %s18
      %p15 = scmp.ge.s32.totalorder %s14, 4
      %s22 = sphi 0, %s22
      %s24 = sphi 0, %s22
      %s25 = sphi 0, %s24
      %s39 = sphi 0, %s25
      %s45 = sphi 0, %s47
      %s48 = sphi 0, %s45
      %s49 = sphi 0, %s48
      %s65 = sphi 0, %s49
      %s71 = sphi 0, %s73
      %s74 = sphi 0, %s71
      %s75 = sphi 0, %s74
      %s91 = sphi 0, %s75
    $region4: #{tpu_custom_call.1} parent=1 // loop_header_branch
      %17 = sbr.rel (%p15) target = $region8
    $region5: #{tpu_custom_call.1} parent=1 // loop_body
      %s19 = ssub.s32 %s14, 1
      %s20 = ssub.s32 %s14, 2
      %s21 = sadd.s32 %s14, 1
      %s23 = sadd.s32 %s22, 1
      %p26 = scmp.eq.s32.totalorder %s14, 1
      %p27 = scmp.ne.s32.totalorder %s22, %s24
      %p28 = scmp.eq.s32.totalorder %s14, 0
      %p29 = por %p27, %p28
      %p30 = scmp.ne.s32.totalorder %s22, %s24
      %p31 = scmp.eq.s32.totalorder %s19, 1
      %p32 = por %p30, %p31
      %p33 = scmp.ne.s32.totalorder %s24, %s25
      %p34 = scmp.eq.s32.totalorder %s19, 0
      %p35 = por %p33, %p34
      %p36 = scmp.ne.s32.totalorder %s24, %s25
      %p37 = scmp.eq.s32.totalorder %s20, 1
      %p38 = por %p36, %p37
      %p40 = scmp.ne.s32.totalorder %s25, %s39
      %p41 = scmp.eq.s32.totalorder %s20, 0
      %p42 = por %p40, %p41
      %s43 = ssub.s32 %s14, %s21
      %p44 = scmp.eq.s32.totalorder %s43, 0
      %s46 = sadd.s32 %s45, 1
      %s47 = scalar_select %p44, %s45, %s46
      %p50 = pneg %p44
      %p51 = scmp.eq.s32.totalorder %s14, 1
      %p52 = por %p50, %p51
      %p53 = scmp.ne.s32.totalorder %s45, %s48
      %p54 = scmp.eq.s32.totalorder %s14, 0
      %p55 = por %p53, %p54
      %p56 = scmp.ne.s32.totalorder %s45, %s48
      %p57 = scmp.eq.s32.totalorder %s19, 1
      %p58 = por %p56, %p57
      %p59 = scmp.ne.s32.totalorder %s48, %s49
      %p60 = scmp.eq.s32.totalorder %s19, 0
      %p61 = por %p59, %p60
      %p62 = scmp.ne.s32.totalorder %s48, %s49
      %p63 = scmp.eq.s32.totalorder %s20, 1
      %p64 = por %p62, %p63
      %p66 = scmp.ne.s32.totalorder %s49, %s65
      %p67 = scmp.eq.s32.totalorder %s20, 0
      %p68 = por %p66, %p67
      %s69 = ssub.s32 %s14, %s21
      %p70 = scmp.eq.s32.totalorder %s69, 0
      %s72 = sadd.s32 %s71, 1
      %s73 = scalar_select %p70, %s71, %s72
      %p76 = pneg %p70
      %p77 = scmp.eq.s32.totalorder %s14, 1
      %p78 = por %p76, %p77
      %p79 = scmp.ne.s32.totalorder %s71, %s74
      %p80 = scmp.eq.s32.totalorder %s14, 0
      %p81 = por %p79, %p80
      %p82 = scmp.ne.s32.totalorder %s71, %s74
      %p83 = scmp.eq.s32.totalorder %s19, 1
      %p84 = por %p82, %p83
      %p85 = scmp.ne.s32.totalorder %s74, %s75
      %p86 = scmp.eq.s32.totalorder %s19, 0
      %p87 = por %p85, %p86
      %p88 = scmp.ne.s32.totalorder %s74, %s75
      %p89 = scmp.eq.s32.totalorder %s20, 1
      %p90 = por %p88, %p89
      %p92 = scmp.ne.s32.totalorder %s75, %s91
      %p93 = scmp.eq.s32.totalorder %s20, 0
      %p94 = por %p92, %p93
      %p95 = scmp.le.s32.totalorder 1, %s14
      %p96 = scmp.lt.s32.totalorder %s14, 3
      %p97 = pnand %p95, %p96
      %p98 = pneg %p97
      // Predicated region
      $region9: #{tpu_custom_call.1} parent=5 // pred_check
        _
      $region10: #{tpu_custom_call.1} parent=5 // pred_check_branch
        %100 = sbr.rel (%p97) target = $region12
      $region11: #{tpu_custom_call.1} parent=5 // pred_region
        %s101 = ssub.s32 %s14, 1
        // Predicated region
        $region13: #{tpu_custom_call.1} parent=11 // pred_check
          %p102 = pneg %p35
        $region14: #{tpu_custom_call.1} parent=11 // pred_check_branch
          %104 = sbr.rel (%p102) target = $region16
        $region15: #{tpu_custom_call.1} parent=11 // pred_region
          _
        $region16: #{tpu_custom_call.1} parent=11 // pred_fallthru
          _
      $region12: #{tpu_custom_call.1} parent=5 // pred_fallthru
        _
      %p105 = scmp.lt.s32.totalorder %s14, 2
      // Predicated region
      $region17: #{tpu_custom_call.1} parent=5 // pred_check
        %p106 = pneg %p105
      $region18: #{tpu_custom_call.1} parent=5 // pred_check_branch
        %108 = sbr.rel (%p106) target = $region20
      $region19: #{tpu_custom_call.1} parent=5 // pred_region
        // Predicated region
        $region21: #{tpu_custom_call.1} parent=19 // pred_check
          %p109 = pneg %p55
        $region22: #{tpu_custom_call.1} parent=19 // pred_check_branch
          %111 = sbr.rel (%p109) target = $region24
        $region23: #{tpu_custom_call.1} parent=19 // pred_region
          %s112 = sand.u32 %s45, 1
          %s113 = scalar_lea.sflag [#allocation3], %s112
          %s114 = sand.u32 %s45, 1
          %s115 = smul.addr %s114, 512
          %s116 = scalar_lea.vmem [#allocation2], %s115
          %s117 = smul.u32 4, %s14
          %s119 = ssub.s32 8192, 8192
          %120 = vsyncadd %s113, %s119
          %s121 = smul.addr %s117, 128
          %s122 = scalar_lea.hbm %s1, %s121
          %s123 = sshll.u32 %s116, 4
          %s124 = int_to_ptr.vmem [resolvable:$true] %s123
          %129 = dma.hbm_to_vmem [thread:$0]  %s122, 8192, %s124, %s113, 1024, 512, 32
        $region24: #{tpu_custom_call.1} parent=19 // pred_fallthru
          _
      $region20: #{tpu_custom_call.1} parent=5 // pred_fallthru
        _
      %p130 = scmp.le.s32.totalorder 1, %s14
      %p131 = scmp.lt.s32.totalorder %s14, 3
      %p132 = pnand %p130, %p131
      %p133 = pneg %p132
      // Predicated region
      $region25: #{tpu_custom_call.1} parent=5 // pred_check
        _
      $region26: #{tpu_custom_call.1} parent=5 // pred_check_branch
        %135 = sbr.rel (%p132) target = $region28
      $region27: #{tpu_custom_call.1} parent=5 // pred_region
        %s136 = ssub.s32 %s14, 1
        %s137 = sand.u32 %s48, 1
        %s138 = scalar_lea.sflag [#allocation3], %s137
        %s139 = sand.u32 %s48, 1
        %s140 = smul.addr %s139, 512
        %s141 = scalar_lea.vmem [#allocation2], %s140
        // Predicated region
        $region29: #{tpu_custom_call.1} parent=27 // pred_check
          %p142 = pneg %p61
        $region30: #{tpu_custom_call.1} parent=27 // pred_check_branch
          %144 = sbr.rel (%p142) target = $region32
        $region31: #{tpu_custom_call.1} parent=27 // pred_region
          %145 = dma.done %s138, 8192
        $region32: #{tpu_custom_call.1} parent=27 // pred_fallthru
          _
        %p146 = pneg %p35
        %p147 = pneg %p32
        %s148 = sand.u32 %s48, 1
        %s149 = scalar_lea.sflag [#allocation3], %s148
        %s150 = sand.u32 %s48, 1
        %s151 = smul.addr %s150, 512
        %s152 = scalar_lea.vmem [#allocation2], %s151
        %p153 = pneg %p61
        %p154 = pneg %p58
        %p155 = pneg %p87
        %p156 = pneg %p84
        %s157 = sand.u32 %s74, 1
        %s158 = scalar_lea.sflag [#allocation4], %s157
        %s159 = sand.u32 %s74, 1
        %s160 = smul.addr %s159, 4
        %s161 = scalar_lea.vmem [#allocation5], %s160
        %s162 = smul.u32 4, %s19
        %s163 = smul.u32 4, %s19
        %v164 = vld [vmem:[%s141] sm:$0xff]
        %v165 = vld [vmem:[%s141 + $0x8] sm:$0xff]
        %v166 = vld [vmem:[%s141 + $0x10] sm:$0xff]
        %v167 = vld [vmem:[%s141 + $0x18] sm:$0xff]
        %v168 = vld [vmem:[%s141 + $0x20] sm:$0xff]
        %v169 = vld [vmem:[%s141 + $0x28] sm:$0xff]
        %v170 = vld [vmem:[%s141 + $0x30] sm:$0xff]
        %v171 = vld [vmem:[%s141 + $0x38] sm:$0xff]
        %v172 = vld [vmem:[%s141 + $0x40] sm:$0xff]
        %v173 = vld [vmem:[%s141 + $0x48] sm:$0xff]
        %v174 = vld [vmem:[%s141 + $0x50] sm:$0xff]
        %v175 = vld [vmem:[%s141 + $0x58] sm:$0xff]
        %v176 = vld [vmem:[%s141 + $0x60] sm:$0xff]
        %v177 = vld [vmem:[%s141 + $0x68] sm:$0xff]
        %v178 = vld [vmem:[%s141 + $0x70] sm:$0xff]
        %v179 = vld [vmem:[%s141 + $0x78] sm:$0xff]
        %v180 = vld [vmem:[%s141 + $0x80] sm:$0xff]
        %v181 = vld [vmem:[%s141 + $0x88] sm:$0xff]
        %v182 = vld [vmem:[%s141 + $0x90] sm:$0xff]
        %v183 = vld [vmem:[%s141 + $0x98] sm:$0xff]
        %v184 = vld [vmem:[%s141 + $0xa0] sm:$0xff]
        %v185 = vld [vmem:[%s141 + $0xa8] sm:$0xff]
        %v186 = vld [vmem:[%s141 + $0xb0] sm:$0xff]
        %v187 = vld [vmem:[%s141 + $0xb8] sm:$0xff]
        %v188 = vld [vmem:[%s141 + $0xc0] sm:$0xff]
        %v189 = vld [vmem:[%s141 + $0xc8] sm:$0xff]
        %v190 = vld [vmem:[%s141 + $0xd0] sm:$0xff]
        %v191 = vld [vmem:[%s141 + $0xd8] sm:$0xff]
        %v192 = vld [vmem:[%s141 + $0xe0] sm:$0xff]
        %v193 = vld [vmem:[%s141 + $0xe8] sm:$0xff]
        %v194 = vld [vmem:[%s141 + $0xf0] sm:$0xff]
        %v195 = vld [vmem:[%s141 + $0xf8] sm:$0xff]
        %v196 = vld [vmem:[%s141 + $0x100] sm:$0xff]
        %v197 = vld [vmem:[%s141 + $0x108] sm:$0xff]
        %v198 = vld [vmem:[%s141 + $0x110] sm:$0xff]
        %v199 = vld [vmem:[%s141 + $0x118] sm:$0xff]
        %v200 = vld [vmem:[%s141 + $0x120] sm:$0xff]
        %v201 = vld [vmem:[%s141 + $0x128] sm:$0xff]
        %v202 = vld [vmem:[%s141 + $0x130] sm:$0xff]
        %v203 = vld [vmem:[%s141 + $0x138] sm:$0xff]
        %v204 = vld [vmem:[%s141 + $0x140] sm:$0xff]
        %v205 = vld [vmem:[%s141 + $0x148] sm:$0xff]
        %v206 = vld [vmem:[%s141 + $0x150] sm:$0xff]
        %v207 = vld [vmem:[%s141 + $0x158] sm:$0xff]
        %v208 = vld [vmem:[%s141 + $0x160] sm:$0xff]
        %v209 = vld [vmem:[%s141 + $0x168] sm:$0xff]
        %v210 = vld [vmem:[%s141 + $0x170] sm:$0xff]
        %v211 = vld [vmem:[%s141 + $0x178] sm:$0xff]
        %v212 = vld [vmem:[%s141 + $0x180] sm:$0xff]
        %v213 = vld [vmem:[%s141 + $0x188] sm:$0xff]
        %v214 = vld [vmem:[%s141 + $0x190] sm:$0xff]
        %v215 = vld [vmem:[%s141 + $0x198] sm:$0xff]
        %v216 = vld [vmem:[%s141 + $0x1a0] sm:$0xff]
        %v217 = vld [vmem:[%s141 + $0x1a8] sm:$0xff]
        %v218 = vld [vmem:[%s141 + $0x1b0] sm:$0xff]
        %v219 = vld [vmem:[%s141 + $0x1b8] sm:$0xff]
        %v220 = vld [vmem:[%s141 + $0x1c0] sm:$0xff]
        %v221 = vld [vmem:[%s141 + $0x1c8] sm:$0xff]
        %v222 = vld [vmem:[%s141 + $0x1d0] sm:$0xff]
        %v223 = vld [vmem:[%s141 + $0x1d8] sm:$0xff]
        %v224 = vld [vmem:[%s141 + $0x1e0] sm:$0xff]
        %v225 = vld [vmem:[%s141 + $0x1e8] sm:$0xff]
        %v226 = vld [vmem:[%s141 + $0x1f0] sm:$0xff]
        %v227 = vld [vmem:[%s141 + $0x1f8] sm:$0xff]
        %v228 = vld [vmem:[%s0] sm:$0xff]
        %v229 = vld [vmem:[%s0 + $0x8] sm:$0xff]
        %v230 = vld [vmem:[%s0 + $0x10] sm:$0xff]
        %v231 = vld [vmem:[%s0 + $0x18] sm:$0xff]
        %v232 = vld [vmem:[%s0 + $0x20] sm:$0xff]
        %v233 = vld [vmem:[%s0 + $0x28] sm:$0xff]
        %v234 = vld [vmem:[%s0 + $0x30] sm:$0xff]
        %v235 = vld [vmem:[%s0 + $0x38] sm:$0xff]
        %v236 = vld [vmem:[%s0 + $0x40] sm:$0xff]
        %v237 = vld [vmem:[%s0 + $0x48] sm:$0xff]
        %v238 = vld [vmem:[%s0 + $0x50] sm:$0xff]
        %v239 = vld [vmem:[%s0 + $0x58] sm:$0xff]
        %v240 = vld [vmem:[%s0 + $0x60] sm:$0xff]
        %v241 = vld [vmem:[%s0 + $0x68] sm:$0xff]
        %v242 = vld [vmem:[%s0 + $0x70] sm:$0xff]
        %v243 = vld [vmem:[%s0 + $0x78] sm:$0xff]
        %245 = vset.pattern.permute.xlu0 0
        %246 = vperm.xlu0 %245, %v228
        %v247 = vpop.permute.xlu0 %246
        %250 = vset.pattern.permute.xlu0 0
        %251 = vperm.xlu0 %250, %v229
        %v252 = vpop.permute.xlu0 %251
        %255 = vset.pattern.permute.xlu0 0
        %256 = vperm.xlu0 %255, %v230
        %v257 = vpop.permute.xlu0 %256
        %260 = vset.pattern.permute.xlu0 0
        %261 = vperm.xlu0 %260, %v231
        %v262 = vpop.permute.xlu0 %261
        %265 = vset.pattern.permute.xlu0 0
        %266 = vperm.xlu0 %265, %v232
        %v267 = vpop.permute.xlu0 %266
        %270 = vset.pattern.permute.xlu0 0
        %271 = vperm.xlu0 %270, %v233
        %v272 = vpop.permute.xlu0 %271
        %275 = vset.pattern.permute.xlu0 0
        %276 = vperm.xlu0 %275, %v234
        %v277 = vpop.permute.xlu0 %276
        %280 = vset.pattern.permute.xlu0 0
        %281 = vperm.xlu0 %280, %v235
        %v282 = vpop.permute.xlu0 %281
        %285 = vset.pattern.permute.xlu0 0
        %286 = vperm.xlu0 %285, %v236
        %v287 = vpop.permute.xlu0 %286
        %290 = vset.pattern.permute.xlu0 0
        %291 = vperm.xlu0 %290, %v237
        %v292 = vpop.permute.xlu0 %291
        %295 = vset.pattern.permute.xlu0 0
        %296 = vperm.xlu0 %295, %v238
        %v297 = vpop.permute.xlu0 %296
        %300 = vset.pattern.permute.xlu0 0
        %301 = vperm.xlu0 %300, %v239
        %v302 = vpop.permute.xlu0 %301
        %305 = vset.pattern.permute.xlu0 0
        %306 = vperm.xlu0 %305, %v240
        %v307 = vpop.permute.xlu0 %306
        %310 = vset.pattern.permute.xlu0 0
        %311 = vperm.xlu0 %310, %v241
        %v312 = vpop.permute.xlu0 %311
        %315 = vset.pattern.permute.xlu0 0
        %316 = vperm.xlu0 %315, %v242
        %v317 = vpop.permute.xlu0 %316
        %320 = vset.pattern.permute.xlu0 0
        %321 = vperm.xlu0 %320, %v243
        %v322 = vpop.permute.xlu0 %321
        %v324 = vmul.f32 %v164, %v247
        %v325 = vmul.f32 %v165, %v247
        %v326 = vmul.f32 %v166, %v247
        %v327 = vmul.f32 %v167, %v247
        %v328 = vmul.f32 %v168, %v252
        %v329 = vmul.f32 %v169, %v252
        %v330 = vmul.f32 %v170, %v252
        %v331 = vmul.f32 %v171, %v252
        %v332 = vmul.f32 %v172, %v257
        %v333 = vmul.f32 %v173, %v257
        %v334 = vmul.f32 %v174, %v257
        %v335 = vmul.f32 %v175, %v257
        %v336 = vmul.f32 %v176, %v262
        %v337 = vmul.f32 %v177, %v262
        %v338 = vmul.f32 %v178, %v262
        %v339 = vmul.f32 %v179, %v262
        %v340 = vmul.f32 %v180, %v267
        %v341 = vmul.f32 %v181, %v267
        %v342 = vmul.f32 %v182, %v267
        %v343 = vmul.f32 %v183, %v267
        %v344 = vmul.f32 %v184, %v272
        %v345 = vmul.f32 %v185, %v272
        %v346 = vmul.f32 %v186, %v272
        %v347 = vmul.f32 %v187, %v272
        %v348 = vmul.f32 %v188, %v277
        %v349 = vmul.f32 %v189, %v277
        %v350 = vmul.f32 %v190, %v277
        %v351 = vmul.f32 %v191, %v277
        %v352 = vmul.f32 %v192, %v282
        %v353 = vmul.f32 %v193, %v282
        %v354 = vmul.f32 %v194, %v282
        %v355 = vmul.f32 %v195, %v282
        %v356 = vmul.f32 %v196, %v287
        %v357 = vmul.f32 %v197, %v287
        %v358 = vmul.f32 %v198, %v287
        %v359 = vmul.f32 %v199, %v287
        %v360 = vmul.f32 %v200, %v292
        %v361 = vmul.f32 %v201, %v292
        %v362 = vmul.f32 %v202, %v292
        %v363 = vmul.f32 %v203, %v292
        %v364 = vmul.f32 %v204, %v297
        %v365 = vmul.f32 %v205, %v297
        %v366 = vmul.f32 %v206, %v297
        %v367 = vmul.f32 %v207, %v297
        %v368 = vmul.f32 %v208, %v302
        %v369 = vmul.f32 %v209, %v302
        %v370 = vmul.f32 %v210, %v302
        %v371 = vmul.f32 %v211, %v302
        %v372 = vmul.f32 %v212, %v307
        %v373 = vmul.f32 %v213, %v307
        %v374 = vmul.f32 %v214, %v307
        %v375 = vmul.f32 %v215, %v307
        %v376 = vmul.f32 %v216, %v312
        %v377 = vmul.f32 %v217, %v312
        %v378 = vmul.f32 %v218, %v312
        %v379 = vmul.f32 %v219, %v312
        %v380 = vmul.f32 %v220, %v317
        %v381 = vmul.f32 %v221, %v317
        %v382 = vmul.f32 %v222, %v317
        %v383 = vmul.f32 %v223, %v317
        %v384 = vmul.f32 %v224, %v322
        %v385 = vmul.f32 %v225, %v322
        %v386 = vmul.f32 %v226, %v322
        %v387 = vmul.f32 %v227, %v322
        %v388 = vadd.f32 %v324, %v328
        %v389 = vadd.f32 %v388, %v332
        %v390 = vadd.f32 %v389, %v336
        %v391 = vadd.f32 %v390, %v340
        %v392 = vadd.f32 %v391, %v344
        %v393 = vadd.f32 %v392, %v348
        %v394 = vadd.f32 %v393, %v352
        %v395 = vadd.f32 %v394, %v356
        %v396 = vadd.f32 %v395, %v360
        %v397 = vadd.f32 %v396, %v364
        %v398 = vadd.f32 %v397, %v368
        %v399 = vadd.f32 %v398, %v372
        %v400 = vadd.f32 %v399, %v376
        %v401 = vadd.f32 %v400, %v380
        %v402 = vadd.f32 %v401, %v384
        %v403 = vrot.slane %v402, 4
        %v404 = vadd.f32 %v402, %v403
        %v405 = vrot.slane %v404, 2
        %v406 = vadd.f32 %v404, %v405
        %v407 = vrot.slane %v406, 1
        %v408 = vadd.f32 %v406, %v407
        %v409 = vadd.f32 %v325, %v329
        %v410 = vadd.f32 %v409, %v333
        %v411 = vadd.f32 %v410, %v337
        %v412 = vadd.f32 %v411, %v341
        %v413 = vadd.f32 %v412, %v345
        %v414 = vadd.f32 %v413, %v349
        %v415 = vadd.f32 %v414, %v353
        %v416 = vadd.f32 %v415, %v357
        %v417 = vadd.f32 %v416, %v361
        %v418 = vadd.f32 %v417, %v365
        %v419 = vadd.f32 %v418, %v369
        %v420 = vadd.f32 %v419, %v373
        %v421 = vadd.f32 %v420, %v377
        %v422 = vadd.f32 %v421, %v381
        %v423 = vadd.f32 %v422, %v385
        %v424 = vrot.slane %v423, 4
        %v425 = vadd.f32 %v423, %v424
        %v426 = vrot.slane %v425, 2
        %v427 = vadd.f32 %v425, %v426
        %v428 = vrot.slane %v427, 1
        %v429 = vadd.f32 %v427, %v428
        %v430 = vadd.f32 %v326, %v330
        %v431 = vadd.f32 %v430, %v334
        %v432 = vadd.f32 %v431, %v338
        %v433 = vadd.f32 %v432, %v342
        %v434 = vadd.f32 %v433, %v346
        %v435 = vadd.f32 %v434, %v350
        %v436 = vadd.f32 %v435, %v354
        %v437 = vadd.f32 %v436, %v358
        %v438 = vadd.f32 %v437, %v362
        %v439 = vadd.f32 %v438, %v366
        %v440 = vadd.f32 %v439, %v370
        %v441 = vadd.f32 %v440, %v374
        %v442 = vadd.f32 %v441, %v378
        %v443 = vadd.f32 %v442, %v382
        %v444 = vadd.f32 %v443, %v386
        %v445 = vrot.slane %v444, 4
        %v446 = vadd.f32 %v444, %v445
        %v447 = vrot.slane %v446, 2
        %v448 = vadd.f32 %v446, %v447
        %v449 = vrot.slane %v448, 1
        %v450 = vadd.f32 %v448, %v449
        %v451 = vadd.f32 %v327, %v331
        %v452 = vadd.f32 %v451, %v335
        %v453 = vadd.f32 %v452, %v339
        %v454 = vadd.f32 %v453, %v343
        %v455 = vadd.f32 %v454, %v347
        %v456 = vadd.f32 %v455, %v351
        %v457 = vadd.f32 %v456, %v355
        %v458 = vadd.f32 %v457, %v359
        %v459 = vadd.f32 %v458, %v363
        %v460 = vadd.f32 %v459, %v367
        %v461 = vadd.f32 %v460, %v371
        %v462 = vadd.f32 %v461, %v375
        %v463 = vadd.f32 %v462, %v379
        %v464 = vadd.f32 %v463, %v383
        %v465 = vadd.f32 %v464, %v387
        %v466 = vrot.slane %v465, 4
        %v467 = vadd.f32 %v465, %v466
        %v468 = vrot.slane %v467, 2
        %v469 = vadd.f32 %v467, %v468
        %v470 = vrot.slane %v469, 1
        %v471 = vadd.f32 %v469, %v470
        %v476 = vcombine.low %v408, %v429
        %v477 = vcombine.low %v450, %v471
        %v479 = vunpack.c.l.s4 1966171168
        %v480 = vunpack.c.0.s8 %v479
        %v481 = vlaneseq
        %v482 = vshrl.u32 %v481, 7
        %v483 = vsub.s32 %v480, %v482
        %v484 = vrot.slane %v476, %v483
        %v486 = vunpack.c.l.s4 1966171168
        %v487 = vunpack.c.0.s8 %v486
        %v488 = vlaneseq
        %v489 = vshrl.u32 %v488, 7
        %v490 = vsub.s32 %v487, %v489
        %v491 = vrot.slane %v477, %v490
        %v492 = vcombine.low %v484, %v491
        %v494 = vunpack.c.l.s4 1966171168
        %v495 = vunpack.c.0.s8 %v494
        %v496 = vlaneseq
        %v497 = vshrl.u32 %v496, 7
        %v498 = vsub.s32 %v495, %v497
        %v499 = vrot.slane %v492, %v498
        %v501 = vlaneseq
        %vm502 = vcmp.ge.s32.totalorder %v501, 0
        %vm503 = vcmp.lt.s32.totalorder %v501, 512
        %vm504 = vmand %vm502, %vm503
        %505 = vst.msk [vmem:[%s161] sm:$0xf] %vm504, %v499
        %s506 = sand.u32 %s74, 1
        %s507 = scalar_lea.sflag [#allocation4], %s506
        %s508 = sand.u32 %s74, 1
        %s509 = smul.addr %s508, 4
        %s510 = scalar_lea.vmem [#allocation5], %s509
        // Predicated region
        $region33: #{tpu_custom_call.1} parent=27 // pred_check
          %p511 = pneg %p84
        $region34: #{tpu_custom_call.1} parent=27 // pred_check_branch
          %513 = sbr.rel (%p511) target = $region36
        $region35: #{tpu_custom_call.1} parent=27 // pred_region
          %s514 = smul.u32 4, %s19
          %s516 = ssub.s32 64, 64
          %517 = vsyncadd %s507, %s516
          %s518 = smul.addr %s514, 16
          %s519 = scalar_lea.hbm %s2, %s518
          %s521 = sshll.u32 %s510, 4
          %s522 = int_to_ptr.vmem [resolvable:$true] %s521
          %524 = dma.vmem_to_hbm [thread:$0]  %s522, 64, %s519, %s507
        $region36: #{tpu_custom_call.1} parent=27 // pred_fallthru
          _
      $region28: #{tpu_custom_call.1} parent=5 // pred_fallthru
        _
      %p525 = scmp.le.s32.totalorder 2, %s14
      // Predicated region
      $region37: #{tpu_custom_call.1} parent=5 // pred_check
        %p526 = pneg %p525
      $region38: #{tpu_custom_call.1} parent=5 // pred_check_branch
        %528 = sbr.rel (%p526) target = $region40
      $region39: #{tpu_custom_call.1} parent=5 // pred_region
        %s529 = ssub.s32 %s14, 2
        // Predicated region
        $region41: #{tpu_custom_call.1} parent=39 // pred_check
          %p530 = pneg %p90
        $region42: #{tpu_custom_call.1} parent=39 // pred_check_branch
          %532 = sbr.rel (%p530) target = $region44
        $region43: #{tpu_custom_call.1} parent=39 // pred_region
          %s533 = sand.u32 %s75, 1
          %s534 = scalar_lea.sflag [#allocation4], %s533
          %s535 = sand.u32 %s75, 1
          %s536 = smul.addr %s535, 4
          %s537 = scalar_lea.vmem [#allocation5], %s536
          %538 = dma.done %s534, 64
        $region44: #{tpu_custom_call.1} parent=39 // pred_fallthru
          _
      $region40: #{tpu_custom_call.1} parent=5 // pred_fallthru
        _
    $region6: #{tpu_custom_call.1} parent=1 // loop_footer
      %s18 = sadd.s32 1, %s14
    $region7: #{tpu_custom_call.1} parent=1 // loop_footer_branch
      %13 = sbr.rel target = $region3
    $region8: #{tpu_custom_call.1} parent=1 // loop_exit
      _
    %539 = vsyncpa [#allocation3], 1
    %s540 = scalar_lea.sflag [#allocation3], 1
    %541 = vsyncpa %s540, 1
    %542 = vsyncpa [#allocation4], 1
    %s543 = scalar_lea.sflag [#allocation4], 1
    %544 = vsyncpa %s543, 1

</llo_original>
